<compile_context>
chip_gen: v7x
topology: tpu7x:2x2x1
jax: 0.10.0
libtpu: 0.0.40
codegen_flags: <defaults>
</compile_context>

<pallas_src>
import functools

import jax
import jax.numpy as jnp
from jax import lax
from jax.experimental import pallas as pl
from jax.experimental.pallas import tpu as pltpu

IN_FEATURES = 18
HIDDEN = 8


def _round_up(n, m):
    return ((n + m - 1) // m) * m


def ann_kernel(x_ref, w1_ref, b1_ref, w2_ref, b2_ref, o_ref):
    # x_ref:  (TB, 18)  batch tile, natural nn.Linear layout
    # w1_ref: (8, 18)   first Linear weight (PyTorch layout), VMEM resident
    # b1_ref: (8, 1)
    # w2_ref: (8, 1)    second Linear weight as a column
    # b2_ref: (1, 1)
    # o_ref:  (1, TB)   lane-dense output tile
    #
    # Layer 1 on the MXU: contract the 18-feature axis of BOTH operands,
    # (8,18) x (TB,18)^T -> (8, TB).  The feature-major view of x exists only
    # inside VMEM, never in HBM.
    h = lax.dot_general(
        w1_ref[...],
        x_ref[...],
        dimension_numbers=(((1,), (1,)), ((), ())),
        preferred_element_type=jnp.float32,
    ) + b1_ref[...]
    # sigmoid(z) = 0.5 * tanh(0.5 * z) + 0.5  -> single EUP op, exact.
    h = 0.5 * jnp.tanh(0.5 * h) + 0.5

    # Layer 2 (8 -> 1): VPU multiply + 8-wide sublane reduce; result stays in
    # the lane-dense (1, TB) layout for a dense store.
    y = jnp.sum(h * w2_ref[...], axis=0, keepdims=True) + b2_ref[...]
    o_ref[...] = 0.5 * jnp.tanh(0.5 * y) + 0.5


@functools.partial(jax.jit, static_argnames=("max_tile",))
def ann_forward(x, w1, b1, w2, b2, *, max_tile=16384):
    """Forward pass of ANN.

    Args (PyTorch nn.Linear conventions):
      x:  (B, 18) float32
      w1: (8, 18) float32, b1: (8,) float32
      w2: (1, 8)  float32, b2: (1,) float32
    Returns:
      (B, 1) float32
    """
    B = x.shape[0]
    # Lane-aligned batch tile: multiple of 128, capped at max_tile, and also
    # capped at ceil(B/2) so the grid has >= 2 "parallel" steps whenever the
    # batch allows it (keeps both v7x TensorCores busy).
    tb = min(max_tile, _round_up(max(pl.cdiv(B, 2), 1), 128))
    grid = pl.cdiv(B, tb)
    b_pad = grid * tb  # padded output width; garbage columns sliced off below

    xf = x.astype(jnp.float32)
    w1f = w1.astype(jnp.float32)
    b1c = b1.reshape(HIDDEN, 1).astype(jnp.float32)
    w2c = w2.reshape(HIDDEN, 1).astype(jnp.float32)  # (1, 8) -> column (8, 1)
    b2c = b2.reshape(1, 1).astype(jnp.float32)

    cost = pl.CostEstimate(
        flops=2 * B * (IN_FEATURES * HIDDEN + HIDDEN),
        transcendentals=B * (HIDDEN + 1),
        bytes_accessed=B * (IN_FEATURES + 1) * 4
        + (IN_FEATURES * HIDDEN + 2 * HIDDEN + 1) * 4,
    )

    out = pl.pallas_call(
        ann_kernel,
        out_shape=jax.ShapeDtypeStruct((1, b_pad), jnp.float32),
        grid=(grid,),
        in_specs=[
            pl.BlockSpec((tb, IN_FEATURES), lambda i: (i, 0)),      # x tile
            pl.BlockSpec((HIDDEN, IN_FEATURES), lambda i: (0, 0)),  # w1 (resident)
            pl.BlockSpec((HIDDEN, 1), lambda i: (0, 0)),            # b1 (resident)
            pl.BlockSpec((HIDDEN, 1), lambda i: (0, 0)),            # w2 (resident)
            pl.BlockSpec((1, 1), lambda i: (0, 0)),                 # b2 (resident)
        ],
        out_specs=pl.BlockSpec((1, tb), lambda i: (0, i)),
        compiler_params=pltpu.CompilerParams(
            dimension_semantics=("parallel",),
            vmem_limit_bytes=48 * 1024 * 1024,
        ),
        cost_estimate=cost,
    )(xf, w1f, b1c, w2c, b2c)

    # Per-batch-row computation is independent, so padded/garbage columns of
    # the last tile are simply dropped here.
    return out[:, :B].T  # (B, 1)


def reference_forward(x, w1, b1, w2, b2):
    h = jax.nn.sigmoid(x @ w1.T + b1)
    return jax.nn.sigmoid(h @ w2.T + b2)


if __name__ == "__main__":
    key = jax.random.PRNGKey(0)
    kx, k1, kb1, k2, kb2 = jax.random.split(key, 5)

    # nn.Linear-style U(-1/sqrt(fan_in), 1/sqrt(fan_in)) init, PyTorch layouts.
    bound1 = 1.0 / jnp.sqrt(18.0)
    bound2 = 1.0 / jnp.sqrt(8.0)
    w1 = jax.random.uniform(k1, (8, 18), jnp.float32, -bound1, bound1)
    b1 = jax.random.uniform(kb1, (8,), jnp.float32, -bound1, bound1)
    w2 = jax.random.uniform(k2, (1, 8), jnp.float32, -bound2, bound2)
    b2 = jax.random.uniform(kb2, (1,), jnp.float32, -bound2, bound2)

    # Small batch (same semantics as the PyTorch module) plus a slightly larger
    # batch that exercises a 2-step grid with a partial final tile.
    for B in (8, 300):
        x = jax.random.normal(jax.random.fold_in(kx, B), (B, IN_FEATURES), jnp.float32)
        out = jax.block_until_ready(ann_forward(x, w1, b1, w2, b2))
        ref = reference_forward(x, w1, b1, w2, b2)
        assert out.shape == (B, 1), out.shape
        assert jnp.allclose(out, ref, atol=1e-4, rtol=1e-4), (out, ref)

    print("KERNEL_OK")
</pallas_src>

<mosaic_0001>
module attributes {stable_mosaic.version = 11 : i64} {
  func.func @ann_kernel(%arg0: i32, %arg1: memref<128x18xf32, #tpu.memory_space<vmem>>, %arg2: memref<8x18xf32, #tpu.memory_space<vmem>>, %arg3: memref<8x1xf32, #tpu.memory_space<vmem>>, %arg4: memref<8x1xf32, #tpu.memory_space<vmem>>, %arg5: memref<1x1xf32, #tpu.memory_space<vmem>>, %arg6: memref<1x128xf32, #tpu.memory_space<vmem>>) attributes {dimension_semantics = [#tpu.dimension_semantics<parallel>], iteration_bounds = array<i64: 1>, scalar_prefetch = 0 : i64, scratch_operands = 0 : i64, tpu.core_type = #tpu.core_type<tc>, window_params = [{transform_indices = @transform_0, window_bounds = array<i64: 128, 18>}, {pipeline_mode = #tpu.pipeline_mode<synchronous>, transform_indices = @transform_1, window_bounds = array<i64: 8, 18>}, {pipeline_mode = #tpu.pipeline_mode<synchronous>, transform_indices = @transform_2, window_bounds = array<i64: 8, 1>}, {pipeline_mode = #tpu.pipeline_mode<synchronous>, transform_indices = @transform_3, window_bounds = array<i64: 8, 1>}, {pipeline_mode = #tpu.pipeline_mode<synchronous>, transform_indices = @transform_4, window_bounds = array<i64: 1, 1>}, {transform_indices = @transform_5, window_bounds = array<i64: 1, 128>}]} {
    %c0 = arith.constant 0 : index
    %c0_0 = arith.constant 0 : index
    %0 = vector.load %arg2[%c0, %c0_0] : memref<8x18xf32, #tpu.memory_space<vmem>>, vector<8x18xf32>
    %c0_1 = arith.constant 0 : index
    %c0_2 = arith.constant 0 : index
    %1 = vector.load %arg1[%c0_1, %c0_2] : memref<128x18xf32, #tpu.memory_space<vmem>>, vector<128x18xf32>
    %cst = arith.constant dense<0.000000e+00> : vector<8x128xf32>
    %2 = tpu.matmul %0, %1, %cst {dimension_numbers = #tpu.dot_dimension_numbers<[1], [1], [0], [0], [0, 0, 1, 0], [], []>} : vector<8x18xf32>, vector<128x18xf32>, vector<8x128xf32> -> vector<8x128xf32>
    %c0_3 = arith.constant 0 : index
    %c0_4 = arith.constant 0 : index
    %3 = vector.load %arg3[%c0_3, %c0_4] : memref<8x1xf32, #tpu.memory_space<vmem>>, vector<8x1xf32>
    %4 = vector.broadcast %3 : vector<8x1xf32> to vector<8x128xf32>
    %5 = arith.addf %2, %4 : vector<8x128xf32>
    %cst_5 = arith.constant 5.000000e-01 : f32
    %6 = vector.broadcast %cst_5 : f32 to vector<8x128xf32>
    %7 = arith.mulf %6, %5 : vector<8x128xf32>
    %8 = math.tanh %7 : vector<8x128xf32>
    %cst_6 = arith.constant 5.000000e-01 : f32
    %9 = vector.broadcast %cst_6 : f32 to vector<8x128xf32>
    %10 = arith.mulf %9, %8 : vector<8x128xf32>
    %cst_7 = arith.constant 5.000000e-01 : f32
    %11 = vector.broadcast %cst_7 : f32 to vector<8x128xf32>
    %12 = arith.addf %10, %11 : vector<8x128xf32>
    %c0_8 = arith.constant 0 : index
    %c0_9 = arith.constant 0 : index
    %13 = vector.load %arg4[%c0_8, %c0_9] : memref<8x1xf32, #tpu.memory_space<vmem>>, vector<8x1xf32>
    %14 = vector.broadcast %13 : vector<8x1xf32> to vector<8x128xf32>
    %15 = arith.mulf %12, %14 : vector<8x128xf32>
    %cst_10 = arith.constant dense<0.000000e+00> : vector<128xf32>
    %16 = vector.multi_reduction <add>, %15, %cst_10 [0] : vector<8x128xf32> to vector<128xf32>
    %17 = vector.shape_cast %16 : vector<128xf32> to vector<1x128xf32>
    %c0_11 = arith.constant 0 : index
    %c0_12 = arith.constant 0 : index
    %18 = vector.load %arg5[%c0_11, %c0_12] : memref<1x1xf32, #tpu.memory_space<vmem>>, vector<1x1xf32>
    %19 = vector.broadcast %18 : vector<1x1xf32> to vector<1x128xf32>
    %20 = arith.addf %17, %19 : vector<1x128xf32>
    %cst_13 = arith.constant 5.000000e-01 : f32
    %21 = vector.broadcast %cst_13 : f32 to vector<1x128xf32>
    %22 = arith.mulf %21, %20 : vector<1x128xf32>
    %23 = math.tanh %22 : vector<1x128xf32>
    %cst_14 = arith.constant 5.000000e-01 : f32
    %24 = vector.broadcast %cst_14 : f32 to vector<1x128xf32>
    %25 = arith.mulf %24, %23 : vector<1x128xf32>
    %cst_15 = arith.constant 5.000000e-01 : f32
    %26 = vector.broadcast %cst_15 : f32 to vector<1x128xf32>
    %27 = arith.addf %25, %26 : vector<1x128xf32>
    %c0_16 = arith.constant 0 : index
    %c0_17 = arith.constant 0 : index
    %28 = vector.load %arg6[%c0_16, %c0_17] : memref<1x128xf32, #tpu.memory_space<vmem>>, vector<1x128xf32>
    tpu.vector_store %arg6[%c0_16, %c0_17], %27 {strides = array<i32>} : memref<1x128xf32, #tpu.memory_space<vmem>>, vector<1x128xf32>,
    return
  }
  func.func @transform_0(%arg0: i32) -> (i32, i32) {
    %c0_i32 = arith.constant 0 : i32
    %c0_i32_0 = arith.constant 0 : i32
    return %arg0, %c0_i32 : i32, i32
  }
  func.func @transform_1(%arg0: i32) -> (i32, i32) {
    %c0_i32 = arith.constant 0 : i32
    %c0_i32_0 = arith.constant 0 : i32
    %c0_i32_1 = arith.constant 0 : i32
    return %c0_i32, %c0_i32_0 : i32, i32
  }
  func.func @transform_2(%arg0: i32) -> (i32, i32) {
    %c0_i32 = arith.constant 0 : i32
    %c0_i32_0 = arith.constant 0 : i32
    %c0_i32_1 = arith.constant 0 : i32
    return %c0_i32, %c0_i32_0 : i32, i32
  }
  func.func @transform_3(%arg0: i32) -> (i32, i32) {
    %c0_i32 = arith.constant 0 : i32
    %c0_i32_0 = arith.constant 0 : i32
    %c0_i32_1 = arith.constant 0 : i32
    return %c0_i32, %c0_i32_0 : i32, i32
  }
  func.func @transform_4(%arg0: i32) -> (i32, i32) {
    %c0_i32 = arith.constant 0 : i32
    %c0_i32_0 = arith.constant 0 : i32
    %c0_i32_1 = arith.constant 0 : i32
    return %c0_i32, %c0_i32_0 : i32, i32
  }
  func.func @transform_5(%arg0: i32) -> (i32, i32) {
    %c0_i32 = arith.constant 0 : i32
    %c0_i32_0 = arith.constant 0 : i32
    return %c0_i32, %arg0 : i32, i32
  }
}

</mosaic_0001>

<llo_original>
// kernel: ann_forward.1
$region0: #{ann_forward.1}
  #allocation0 [shape = 'u32[]', space=smem, size = 0x4, offset = 0x4, fixed_abs, tag = 'smem constant byte address 0x4 - core index']
  #allocation1 [shape = 'u32[144,128]{1,0:T(1,128)}', space=vmem, size = 0x12000, scoped, tag = 'internal scratch']
  #allocation2 [shape = 'f32[1,1]{1,0:T(1,128)S(1)}', space=vmem, size = 0x200, scoped, tag = 'scoped memory for ann_forward.1']
  %s0 = inlined_call_operand.vmem [shape: f32[8,18], index: 0, kind: input, shape index: {}]
  %s1 = inlined_call_operand.vmem [shape: f32[8,18], index: 1, kind: input, shape index: {}]
  %s2 = inlined_call_operand.vmem [shape: f32[8,1], index: 2, kind: input, shape index: {}]
  %s3 = inlined_call_operand.vmem [shape: f32[8,1], index: 3, kind: input, shape index: {}]
  %s4 = inlined_call_operand.<no memory space> [shape: f32[1,1], index: 4, kind: input, shape index: {}]
  %s5 = inlined_call_operand.vmem [shape: f32[1,128], index: 5, kind: output, shape index: {}]
  %s6 = sld [smem:[#allocation0]]
  $region30: #{ann_forward.1} parent=0
    _
  %s8 = ssub.s32 1, %s6
  %s9 = scalar_select 0, %s8, %s6
  %v10 = vstv %s4
  %11 = vst [vmem:[#allocation2] sm:$0x1] %v10
  // Predicated region
  $region2: #{ann_forward.1} parent=0 // pred_check
    _
  $region3: #{ann_forward.1} parent=0 // pred_check_branch
    %13 = sbr.rel (0) target = $region5
  $region4: #{ann_forward.1} parent=0 // pred_region
    _
  $region5: #{ann_forward.1} parent=0 // pred_fallthru
    _
  // Predicated region
  $region6: #{ann_forward.1} parent=0 // pred_check
    _
  $region7: #{ann_forward.1} parent=0 // pred_check_branch
    %15 = sbr.rel (0) target = $region9
  $region8: #{ann_forward.1} parent=0 // pred_region
    _
  $region9: #{ann_forward.1} parent=0 // pred_fallthru
    _
  // Predicated region
  $region10: #{ann_forward.1} parent=0 // pred_check
    _
  $region11: #{ann_forward.1} parent=0 // pred_check_branch
    %17 = sbr.rel (0) target = $region13
  $region12: #{ann_forward.1} parent=0 // pred_region
    _
  $region13: #{ann_forward.1} parent=0 // pred_fallthru
    _
  // Predicated region
  $region14: #{ann_forward.1} parent=0 // pred_check
    _
  $region15: #{ann_forward.1} parent=0 // pred_check_branch
    %19 = sbr.rel (0) target = $region17
  $region16: #{ann_forward.1} parent=0 // pred_region
    _
  $region17: #{ann_forward.1} parent=0 // pred_fallthru
    _
  // Predicated region
  $region18: #{ann_forward.1} parent=0 // pred_check
    _
  $region19: #{ann_forward.1} parent=0 // pred_check_branch
    %21 = sbr.rel (0) target = $region21
  $region20: #{ann_forward.1} parent=0 // pred_region
    _
  $region21: #{ann_forward.1} parent=0 // pred_fallthru
    _
  %v22 = vld [vmem:[%s1] sm:$0xff]
  %v23 = vld [vmem:[%s0] sm:$0xff]
  %v24 = vld [vmem:[%s0 + $0x8] sm:$0xff]
  %v25 = vld [vmem:[%s0 + $0x10] sm:$0xff]
  %v26 = vld [vmem:[%s0 + $0x18] sm:$0xff]
  %v27 = vld [vmem:[%s0 + $0x20] sm:$0xff]
  %v28 = vld [vmem:[%s0 + $0x28] sm:$0xff]
  %v29 = vld [vmem:[%s0 + $0x30] sm:$0xff]
  %v30 = vld [vmem:[%s0 + $0x38] sm:$0xff]
  %v31 = vld [vmem:[%s0 + $0x40] sm:$0xff]
  %v32 = vld [vmem:[%s0 + $0x48] sm:$0xff]
  %v33 = vld [vmem:[%s0 + $0x50] sm:$0xff]
  %v34 = vld [vmem:[%s0 + $0x58] sm:$0xff]
  %v35 = vld [vmem:[%s0 + $0x60] sm:$0xff]
  %v36 = vld [vmem:[%s0 + $0x68] sm:$0xff]
  %v37 = vld [vmem:[%s0 + $0x70] sm:$0xff]
  %v38 = vld [vmem:[%s0 + $0x78] sm:$0xff]
  %v39 = vld [vmem:[%s2] sm:$0xff]
  %41 = vset.pattern.permute.xlu0 0
  %42 = vperm.xlu0 %41, %v39
  %v43 = vpop.permute.xlu0 %42
  %vm45 = vcmask 146432
  %v47 = vsel %vm45, %v22, 0
  %v50 = vsel %vm45, %v23, 0
  %v53 = vsel %vm45, %v24, 0
  %v56 = vsel %vm45, %v25, 0
  %v59 = vsel %vm45, %v26, 0
  %v62 = vsel %vm45, %v27, 0
  %v65 = vsel %vm45, %v28, 0
  %v68 = vsel %vm45, %v29, 0
  %v71 = vsel %vm45, %v30, 0
  %v74 = vsel %vm45, %v31, 0
  %v77 = vsel %vm45, %v32, 0
  %v80 = vsel %vm45, %v33, 0
  %v83 = vsel %vm45, %v34, 0
  %v86 = vsel %vm45, %v35, 0
  %v89 = vsel %vm45, %v36, 0
  %v92 = vsel %vm45, %v37, 0
  %v95 = vsel %vm45, %v38, 0
  %97 = vmatprep.subr.mxu0 0.0
  %98 = vmatpush1.xpose.msra.mxu0 %v50
  %99 = vmatprep.subr.mxu0 0.0
  %100 = vmatpush1.xpose.msra.mxu0 %v53
  %101 = vmatprep.subr.mxu0 0.0
  %102 = vmatpush1.xpose.msra.mxu0 %v56
  %103 = vmatprep.subr.mxu0 0.0
  %104 = vmatpush1.xpose.msra.mxu0 %v59
  %105 = vmatprep.subr.mxu0 0.0
  %106 = vmatpush1.xpose.msra.mxu0 %v62
  %107 = vmatprep.subr.mxu0 0.0
  %108 = vmatpush1.xpose.msra.mxu0 %v65
  %109 = vmatprep.subr.mxu0 0.0
  %110 = vmatpush1.xpose.msra.mxu0 %v68
  %111 = vmatprep.subr.mxu0 0.0
  %112 = vmatpush1.xpose.msra.mxu0 %v71
  %113 = vmatprep.subr.mxu0 0.0
  %114 = vmatpush1.xpose.msra.mxu0 %v74
  %115 = vmatprep.subr.mxu0 0.0
  %116 = vmatpush1.xpose.msra.mxu0 %v77
  %117 = vmatprep.subr.mxu0 0.0
  %118 = vmatpush1.xpose.msra.mxu0 %v80
  %119 = vmatprep.subr.mxu0 0.0
  %120 = vmatpush1.xpose.msra.mxu0 %v83
  %121 = vmatprep.subr.mxu0 0.0
  %122 = vmatpush1.xpose.msra.mxu0 %v86
  %123 = vmatprep.subr.mxu0 0.0
  %124 = vmatpush1.xpose.msra.mxu0 %v89
  %125 = vmatprep.subr.mxu0 0.0
  %126 = vmatpush1.xpose.msra.mxu0 %v92
  %127 = vmatprep.subr.mxu0 0.0
  %128 = vmatpush1.xpose.msra.mxu0 %v95
  %129 = vmatprep.subr.mxu0 0.0
  %130 = vmatpush1.xpose.msra.mxu0 0.0
  %131 = vmatprep.subr.mxu0 0.0
  %132 = vmatpush1.xpose.msra.mxu0 0.0
  %133 = vmatprep.subr.mxu0 0.0
  %134 = vmatpush1.xpose.msra.mxu0 0.0
  %135 = vmatprep.subr.mxu0 0.0
  %136 = vmatpush1.xpose.msra.mxu0 0.0
  %137 = vmatprep.subr.mxu0 0.0
  %138 = vmatpush1.xpose.msra.mxu0 0.0
  %139 = vmatprep.subr.mxu0 0.0
  %140 = vmatpush1.xpose.msra.mxu0 0.0
  %141 = vmatprep.subr.mxu0 0.0
  %142 = vmatpush1.xpose.msra.mxu0 0.0
  %143 = vmatprep.subr.mxu0 0.0
  %144 = vmatpush1.xpose.msra.mxu0 0.0
  %145 = vmatprep.subr.mxu0 0.0
  %146 = vmatpush1.xpose.msra.mxu0 0.0
  %147 = vmatprep.subr.mxu0 0.0
  %148 = vmatpush1.xpose.msra.mxu0 0.0
  %149 = vmatprep.subr.mxu0 0.0
  %150 = vmatpush1.xpose.msra.mxu0 0.0
  %151 = vmatprep.subr.mxu0 0.0
  %152 = vmatpush1.xpose.msra.mxu0 0.0
  %153 = vmatprep.subr.mxu0 0.0
  %154 = vmatpush1.xpose.msra.mxu0 0.0
  %155 = vmatprep.subr.mxu0 0.0
  %156 = vmatpush1.xpose.msra.mxu0 0.0
  %157 = vmatprep.subr.mxu0 0.0
  %158 = vmatpush1.xpose.msra.mxu0 0.0
  %159 = vmatprep.subr.mxu0 0.0
  %160 = vmatpush1.xpose.msra.mxu0 0.0
  %161 = vmatprep.mubr.f32.mxu0 0.0
  %162 = vmatmul.mubr.f32.gmra.mrb[0].mxu0 %v47
  %v163 = vpop.f32.mrb[0].mxu0
  %v164 = vadd.f32 %v43, %v163
  %v165 = vpop.f32.mrb[0].mxu0
  %166 = vdwg.mxu0
  %v167 = vmul.f32 %v164, 0.5
  %v168 = vtanh.pop %v167
  %v169 = vmul.f32 %v168, 0.5
  %v170 = vadd.f32 %v169, 0.5
  %v171 = vld [vmem:[%s3] sm:$0xff]
  %173 = vset.pattern.permute.xlu0 0
  %174 = vperm.xlu0 %173, %v171
  %v175 = vpop.permute.xlu0 %174
  %v177 = vmul.f32 %v170, %v175
  %v178 = vrot.slane %v177, 4
  %v179 = vadd.f32 %v177, %v178
  %v180 = vrot.slane %v179, 2
  %v181 = vadd.f32 %v179, %v180
  %v182 = vrot.slane %v181, 1
  %v183 = vadd.f32 %v181, %v182
  %v184 = vld [vmem:[#allocation2] sm:$0x1]
  %186 = vset.pattern.permute.xlu0 0
  %187 = vperm.xlu0 %186, %v184
  %v188 = vpop.permute.xlu0 %187
  %v190 = vlaneseq
  %v191 = vshrl.u32 %v190, 7
  %v192 = vsub.s32 0, %v191
  %v193 = vrot.slane %v188, %v192
  %v194 = vadd.f32 %v183, %v193
  %v195 = vmul.f32 %v194, 0.5
  %v196 = vtanh.pop %v195
  %v197 = vmul.f32 %v196, 0.5
  %v198 = vadd.f32 %v197, 0.5
  %199 = vst [vmem:[%s5] sm:$0x1] %v198
  // Predicated region
  $region22: #{ann_forward.1} parent=0 // pred_check
    _
  $region23: #{ann_forward.1} parent=0 // pred_check_branch
    %201 = sbr.rel (0) target = $region25
  $region24: #{ann_forward.1} parent=0 // pred_region
    _
  $region25: #{ann_forward.1} parent=0 // pred_fallthru
    _
  // Predicated region
  $region26: #{ann_forward.1} parent=0 // pred_check
    _
  $region27: #{ann_forward.1} parent=0 // pred_check_branch
    %203 = sbr.rel (0) target = $region29
  $region28: #{ann_forward.1} parent=0 // pred_region
    _
  $region29: #{ann_forward.1} parent=0 // pred_fallthru
    _

</llo_original>
